<compile_context>
chip_gen: v5e
topology: v5e:2x2
jax: 0.10.0
libtpu: 0.0.40
codegen_flags: <defaults>
</compile_context>

<pallas_src>
import functools

import jax
import jax.numpy as jnp
from jax import lax
from jax.experimental import pallas as pl
from jax.experimental.pallas import tpu as pltpu

EPS = 1e-5
_MIB = 1024 * 1024


def _round_up(x, m):
    return ((x + m - 1) // m) * m


def _tpu_vmem_capacity_bytes():
    """Physical VMEM per TensorCore (v5e/v6e: 128 MiB, v7x: 64 MiB)."""
    try:
        return int(pltpu.get_tpu_info().vmem_capacity_bytes)
    except Exception:
        return 64 * _MIB  # conservative fallback (matches v7x)


def _const_spec(shape, single_buffer):
    """BlockSpec for a grid-invariant operand (same block every grid step)."""
    index_map = lambda i: (0,) * len(shape)
    if single_buffer:
        # Constant-index blocks gain nothing from double-buffering; one buffer
        # halves their VMEM footprint (W1 at 2048x2048 is 8 MB even in bf16).
        return pl.BlockSpec(shape, index_map, pipeline_mode=pl.Buffered(1))
    return pl.BlockSpec(shape, index_map)


def _pass1_kernel(x_ref, w1_ref, h_ref, st_ref):
    # x_ref: (TM, Cin) streamed.  w1_ref: (Cin, Hpad) resident.
    h = jnp.dot(x_ref[...], w1_ref[...], preferred_element_type=jnp.float32)
    h_store = h.astype(h_ref.dtype)
    h_ref[...] = h_store
    # BN1 partial stats from the *stored* (possibly bf16-rounded) h so the
    # statistics match exactly what pass 2 re-reads and normalizes.  Padded x
    # rows are exactly zero (and conv bias is dropped) -> they contribute 0.
    hs = h_store.astype(jnp.float32)
    st_ref[0:1, :] = jnp.sum(hs, axis=0, keepdims=True)
    st_ref[1:2, :] = jnp.sum(hs * hs, axis=0, keepdims=True)
    # Rows 2..7 of the stats block are never read by the host-side reduction.


def _pass2_kernel(h_ref, sc1_ref, sh1_ref, w2_ref, y_ref, st_ref,
                  *, tm, m_true, mm_dtype, mask_last):
    # h_ref: (TM, Hpad) streamed.  sc1/sh1: (1, Hpad).  w2_ref: (Hpad, Opad) resident.
    # BN1 affine + ReLU in f32 (v5e's VPU has no bf16 math); cast to the MXU
    # dtype only immediately before the matmul.
    h = h_ref[...].astype(jnp.float32)
    a = jnp.maximum(h * sc1_ref[...] + sh1_ref[...], 0.0)
    y = jnp.dot(a.astype(mm_dtype), w2_ref[...],
                preferred_element_type=jnp.float32)
    y_ref[...] = y.astype(y_ref.dtype)

    def _plain_stats():
        st_ref[0:1, :] = jnp.sum(y, axis=0, keepdims=True)
        st_ref[1:2, :] = jnp.sum(y * y, axis=0, keepdims=True)

    if not mask_last:
        _plain_stats()
    else:
        i = pl.program_id(0)
        is_last = i == pl.num_programs(0) - 1

        @pl.when(jnp.logical_not(is_last))
        def _():
            _plain_stats()

        @pl.when(is_last)
        def _():
            # Only the final tile can contain padded rows (>= true M); mask
            # them so they don't pollute the BN2 batch statistics.
            row = i * tm + lax.broadcasted_iota(jnp.int32, (tm, 1), 0)
            mask = (row < m_true).astype(jnp.float32)
            ym = y * mask
            st_ref[0:1, :] = jnp.sum(ym, axis=0, keepdims=True)
            st_ref[1:2, :] = jnp.sum(ym * y, axis=0, keepdims=True)


def projection_conv_forward(x_nchw, params, *, tm=None,
                            matmul_dtype=jnp.bfloat16,
                            h_dtype=jnp.bfloat16,
                            single_buffer_weights=True,
                            vmem_limit_bytes=None):
    """x_nchw: (N, C_in, H, W) float32.  Returns (N, out_dim, H, W) float32.

    matmul_dtype: dtype of the MXU operands (bf16 recommended on all
      generations; accumulation is always f32 via preferred_element_type).
    h_dtype: HBM storage dtype of the intermediate activation h (written in
      pass 1, re-read in pass 2) -- bf16 halves the dominant HBM traffic.
    """
    (w1, b1, g1, bt1, w2, b2, g2, bt2) = params
    del b1, b2  # conv bias followed by training-mode BN cancels exactly
    N, Cin, H, W = x_nchw.shape
    hidden = w1.shape[0]
    out_dim = w2.shape[0]
    M = N * H * W

    vmem_cap = _tpu_vmem_capacity_bytes()
    if vmem_limit_bytes is None:
        # Never claim the whole physical VMEM (v7x has only 64 MiB per core).
        vmem_limit_bytes = min(vmem_cap - 8 * _MIB, 100 * _MIB)
    if tm is None:
        # Bigger row tiles on 128-MiB parts (v5e/v6e); 512 rows on 64-MiB v7x.
        tm = 1024 if vmem_cap >= 96 * _MIB else 512
    tm = _round_up(min(tm, _round_up(M, 8)), 8)

    Hpad = _round_up(hidden, 128)
    Opad = _round_up(out_dim, 128)
    M_pad = _round_up(M, tm)
    num_tiles = M_pad // tm
    mask_last = M_pad > M

    # NCHW -> NHWC -> (M, Cin); zero-pad rows to M_pad (pad rows stay exactly
    # zero so they contribute nothing to the pass-1 BN stats).
    x2d = jnp.transpose(x_nchw, (0, 2, 3, 1)).reshape(M, Cin)
    if M_pad > M:
        x2d = jnp.pad(x2d, ((0, M_pad - M), (0, 0)))
    x2d = x2d.astype(matmul_dtype)

    # Conv weights (out, in, 1, 1) -> (in, out), zero-padded lane-dense.
    w1t = jnp.pad(w1.reshape(hidden, Cin).T,
                  ((0, 0), (0, Hpad - hidden))).astype(matmul_dtype)
    w2t = jnp.pad(w2.reshape(out_dim, hidden).T,
                  ((0, Hpad - hidden), (0, Opad - out_dim))).astype(matmul_dtype)

    cp = pltpu.CompilerParams(dimension_semantics=("parallel",),
                              vmem_limit_bytes=int(vmem_limit_bytes))

    def _with_fallback(fn):
        if single_buffer_weights:
            try:
                return fn(True)
            except Exception:
                # pl.Buffered(1) unsupported on this jax build: fall back to
                # the default double-buffered constant blocks.
                pass
        return fn(False)

    # ---------------- pass 1: h = x @ W1, BN1 partial stats ----------------
    def _run_pass1(single_buffer):
        return pl.pallas_call(
            _pass1_kernel,
            out_shape=(jax.ShapeDtypeStruct((M_pad, Hpad), h_dtype),
                       jax.ShapeDtypeStruct((num_tiles * 8, Hpad), jnp.float32)),
            grid=(num_tiles,),
            in_specs=[
                pl.BlockSpec((tm, Cin), lambda i: (i, 0)),     # streamed x tile
                _const_spec((Cin, Hpad), single_buffer),       # resident W1
            ],
            out_specs=(
                pl.BlockSpec((tm, Hpad), lambda i: (i, 0)),    # h tile
                pl.BlockSpec((8, Hpad), lambda i: (i, 0)),     # per-tile stats
            ),
            compiler_params=cp,
        )(x2d, w1t)

    h, st1 = _with_fallback(_run_pass1)

    # Reduce BN1 partials in JAX (tiny), build fused affine scale/shift.
    st1 = st1.reshape(num_tiles, 8, Hpad)
    sum1 = jnp.sum(st1[:, 0, :hidden], axis=0)
    sumsq1 = jnp.sum(st1[:, 1, :hidden], axis=0)
    mean1 = sum1 / M
    var1 = jnp.maximum(sumsq1 / M - mean1 * mean1, 0.0)  # clamp cancellation
    scale1 = g1 * lax.rsqrt(var1 + EPS)
    shift1 = bt1 - mean1 * scale1
    scale1_row = jnp.pad(scale1, (0, Hpad - hidden)).reshape(1, Hpad)
    shift1_row = jnp.pad(shift1, (0, Hpad - hidden)).reshape(1, Hpad)

    # -------- pass 2: BN1 affine + ReLU, y = . @ W2, BN2 partial stats -------
    def _run_pass2(single_buffer):
        return pl.pallas_call(
            functools.partial(_pass2_kernel, tm=tm, m_true=M,
                              mm_dtype=matmul_dtype, mask_last=mask_last),
            out_shape=(jax.ShapeDtypeStruct((M_pad, Opad), jnp.float32),
                       jax.ShapeDtypeStruct((num_tiles * 8, Opad), jnp.float32)),
            grid=(num_tiles,),
            in_specs=[
                pl.BlockSpec((tm, Hpad), lambda i: (i, 0)),    # streamed h tile
                _const_spec((1, Hpad), single_buffer),         # BN1 scale
                _const_spec((1, Hpad), single_buffer),         # BN1 shift
                _const_spec((Hpad, Opad), single_buffer),      # resident W2
            ],
            out_specs=(
                pl.BlockSpec((tm, Opad), lambda i: (i, 0)),    # y tile
                pl.BlockSpec((8, Opad), lambda i: (i, 0)),     # per-tile stats
            ),
            compiler_params=cp,
        )(h, scale1_row, shift1_row, w2t)

    y, st2 = _with_fallback(_run_pass2)

    # Reduce BN2 partials; apply final affine fused with the layout restore.
    st2 = st2.reshape(num_tiles, 8, Opad)
    sum2 = jnp.sum(st2[:, 0, :out_dim], axis=0)
    sumsq2 = jnp.sum(st2[:, 1, :out_dim], axis=0)
    mean2 = sum2 / M
    var2 = jnp.maximum(sumsq2 / M - mean2 * mean2, 0.0)
    scale2 = g2 * lax.rsqrt(var2 + EPS)
    shift2 = bt2 - mean2 * scale2

    out2d = y[:M, :out_dim] * scale2[None, :] + shift2[None, :]
    return jnp.transpose(out2d.reshape(N, H, W, out_dim), (0, 3, 1, 2))


def init_params(key, in_dim, hidden_dim, out_dim):
    """Deterministic synthetic parameters (PyTorch BN defaults: gamma=1, beta=0)."""
    k1, k2, k3, k4 = jax.random.split(key, 4)
    w1 = jax.random.normal(k1, (hidden_dim, in_dim, 1, 1), jnp.float32) * 0.1
    b1 = jax.random.normal(k2, (hidden_dim,), jnp.float32) * 0.1
    g1 = jnp.ones((hidden_dim,), jnp.float32)
    bt1 = jnp.zeros((hidden_dim,), jnp.float32)
    w2 = jax.random.normal(k3, (out_dim, hidden_dim, 1, 1), jnp.float32) * 0.1
    b2 = jax.random.normal(k4, (out_dim,), jnp.float32) * 0.1
    g2 = jnp.ones((out_dim,), jnp.float32)
    bt2 = jnp.zeros((out_dim,), jnp.float32)
    return (w1, b1, g1, bt1, w2, b2, g2, bt2)


def _reference_forward(x_nchw, params):
    """Pure-JAX reference mirroring the PyTorch forward (training-mode BN)."""
    (w1, b1, g1, bt1, w2, b2, g2, bt2) = params

    def conv1x1(x, w, b):
        y = jnp.einsum('nchw,oc->nohw', x, w.reshape(w.shape[0], w.shape[1]))
        return y + b[None, :, None, None]

    def bn(x, g, bt):
        mean = jnp.mean(x, axis=(0, 2, 3), keepdims=True)
        var = jnp.mean((x - mean) ** 2, axis=(0, 2, 3), keepdims=True)
        return (x - mean) * lax.rsqrt(var + EPS) * g[None, :, None, None] \
            + bt[None, :, None, None]

    h = jnp.maximum(bn(conv1x1(x_nchw, w1, b1), g1, bt1), 0.0)
    return bn(conv1x1(h, w2, b2), g2, bt2)


if __name__ == "__main__":
    # Small shapes consistent with the module.
    N, Cin, H, W = 2, 4, 16, 16
    hidden_dim, out_dim = 32, 32

    key = jax.random.PRNGKey(0)
    kx, kp = jax.random.split(key)
    x = jax.random.normal(kx, (N, Cin, H, W), jnp.float32)
    params = init_params(kp, Cin, hidden_dim, out_dim)
    ref = _reference_forward(x, params)

    # 1) Full-precision path, tm=128 -> 4 row tiles (multi-tile streaming,
    #    no row padding): strict numerical check.
    out_f32 = jax.block_until_ready(
        projection_conv_forward(x, params, tm=128,
                                matmul_dtype=jnp.float32,
                                h_dtype=jnp.float32))
    assert out_f32.shape == (N, out_dim, H, W), out_f32.shape
    assert jnp.allclose(out_f32, ref, atol=1e-4, rtol=1e-4), \
        float(jnp.max(jnp.abs(out_f32 - ref)))

    # 2) Default bf16 path, tm=192 -> 3 tiles with a padded last tile
    #    (exercises the masked BN2-stats branch): looser check.
    out_bf16 = jax.block_until_ready(projection_conv_forward(x, params, tm=192))
    assert out_bf16.shape == (N, out_dim, H, W), out_bf16.shape
    assert jnp.allclose(out_bf16, ref, atol=1e-1, rtol=1e-1), \
        float(jnp.max(jnp.abs(out_bf16 - ref)))

    print("KERNEL_OK")
</pallas_src>

<mosaic_0001>
module attributes {stable_mosaic.version = 11 : i64} {
  func.func @_pass1_kernel(%arg0: i32, %arg1: memref<128x4xf32, #tpu.memory_space<vmem>>, %arg2: memref<4x128xf32, #tpu.memory_space<vmem>>, %arg3: memref<128x128xf32, #tpu.memory_space<vmem>>, %arg4: memref<8x128xf32, #tpu.memory_space<vmem>>) attributes {dimension_semantics = [#tpu.dimension_semantics<parallel>], iteration_bounds = array<i64: 4>, scalar_prefetch = 0 : i64, scratch_operands = 0 : i64, tpu.core_type = #tpu.core_type<tc>, window_params = [{transform_indices = @transform_0, window_bounds = array<i64: 128, 4>}, {pipeline_mode = #tpu.pipeline_mode<synchronous>, transform_indices = @transform_1, window_bounds = array<i64: 4, 128>}, {transform_indices = @transform_2, window_bounds = array<i64: 128, 128>}, {transform_indices = @transform_3, window_bounds = array<i64: 8, 128>}]} {
    %c0 = arith.constant 0 : index
    %c0_0 = arith.constant 0 : index
    %0 = vector.load %arg1[%c0, %c0_0] : memref<128x4xf32, #tpu.memory_space<vmem>>, vector<128x4xf32>
    %c0_1 = arith.constant 0 : index
    %c0_2 = arith.constant 0 : index
    %1 = vector.load %arg2[%c0_1, %c0_2] : memref<4x128xf32, #tpu.memory_space<vmem>>, vector<4x128xf32>
    %cst = arith.constant dense<0.000000e+00> : vector<128x128xf32>
    %2 = tpu.matmul %0, %1, %cst {dimension_numbers = #tpu.dot_dimension_numbers<[1], [0], [0], [1], [0, 0, 1, 1], [], []>} : vector<128x4xf32>, vector<4x128xf32>, vector<128x128xf32> -> vector<128x128xf32>
    %c0_3 = arith.constant 0 : index
    %c0_4 = arith.constant 0 : index
    %3 = vector.load %arg3[%c0_3, %c0_4] : memref<128x128xf32, #tpu.memory_space<vmem>>, vector<128x128xf32>
    tpu.vector_store %arg3[%c0_3, %c0_4], %2 {strides = array<i32>} : memref<128x128xf32, #tpu.memory_space<vmem>>, vector<128x128xf32>,
    %cst_5 = arith.constant dense<0.000000e+00> : vector<128xf32>
    %4 = vector.multi_reduction <add>, %2, %cst_5 [0] : vector<128x128xf32> to vector<128xf32>
    %5 = vector.shape_cast %4 : vector<128xf32> to vector<1x128xf32>
    %c0_6 = arith.constant 0 : index
    %c0_7 = arith.constant 0 : index
    %6 = vector.load %arg4[%c0_6, %c0_7] : memref<8x128xf32, #tpu.memory_space<vmem>>, vector<1x128xf32>
    tpu.vector_store %arg4[%c0_6, %c0_7], %5 {strides = array<i32>} : memref<8x128xf32, #tpu.memory_space<vmem>>, vector<1x128xf32>,
    %7 = arith.mulf %2, %2 : vector<128x128xf32>
    %cst_8 = arith.constant dense<0.000000e+00> : vector<128xf32>
    %8 = vector.multi_reduction <add>, %7, %cst_8 [0] : vector<128x128xf32> to vector<128xf32>
    %9 = vector.shape_cast %8 : vector<128xf32> to vector<1x128xf32>
    %c1 = arith.constant 1 : index
    %c0_9 = arith.constant 0 : index
    %10 = vector.load %arg4[%c1, %c0_9] : memref<8x128xf32, #tpu.memory_space<vmem>>, vector<1x128xf32>
    tpu.vector_store %arg4[%c1, %c0_9], %9 {strides = array<i32>} : memref<8x128xf32, #tpu.memory_space<vmem>>, vector<1x128xf32>,
    return
  }
  func.func @transform_0(%arg0: i32) -> (i32, i32) {
    %c0_i32 = arith.constant 0 : i32
    %c0_i32_0 = arith.constant 0 : i32
    return %arg0, %c0_i32 : i32, i32
  }
  func.func @transform_1(%arg0: i32) -> (i32, i32) {
    %c0_i32 = arith.constant 0 : i32
    %c0_i32_0 = arith.constant 0 : i32
    %c0_i32_1 = arith.constant 0 : i32
    return %c0_i32, %c0_i32_0 : i32, i32
  }
  func.func @transform_2(%arg0: i32) -> (i32, i32) {
    %c0_i32 = arith.constant 0 : i32
    %c0_i32_0 = arith.constant 0 : i32
    return %arg0, %c0_i32 : i32, i32
  }
  func.func @transform_3(%arg0: i32) -> (i32, i32) {
    %c0_i32 = arith.constant 0 : i32
    %c0_i32_0 = arith.constant 0 : i32
    return %arg0, %c0_i32 : i32, i32
  }
}

module attributes {stable_mosaic.version = 11 : i64} {
  func.func @_pass1_kernel(%arg0: i32, %arg1: memref<128x4xf32, #tpu.memory_space<vmem>>, %arg2: memref<4x128xf32, #tpu.memory_space<vmem>>, %arg3: memref<128x128xf32, #tpu.memory_space<vmem>>, %arg4: memref<8x128xf32, #tpu.memory_space<vmem>>) attributes {dimension_semantics = [#tpu.dimension_semantics<parallel>], iteration_bounds = array<i64: 4>, scalar_prefetch = 0 : i64, scratch_operands = 0 : i64, tpu.core_type = #tpu.core_type<tc>, window_params = [{transform_indices = @transform_0, window_bounds = array<i64: 128, 4>}, {pipeline_mode = #tpu.pipeline_mode<synchronous>, transform_indices = @transform_1, window_bounds = array<i64: 4, 128>}, {transform_indices = @transform_2, window_bounds = array<i64: 128, 128>}, {transform_indices = @transform_3, window_bounds = array<i64: 8, 128>}]} {
    %c0 = arith.constant 0 : index
    %c0_0 = arith.constant 0 : index
    %0 = vector.load %arg1[%c0, %c0_0] : memref<128x4xf32, #tpu.memory_space<vmem>>, vector<128x4xf32>
    %c0_1 = arith.constant 0 : index
    %c0_2 = arith.constant 0 : index
    %1 = vector.load %arg2[%c0_1, %c0_2] : memref<4x128xf32, #tpu.memory_space<vmem>>, vector<4x128xf32>
    %cst = arith.constant dense<0.000000e+00> : vector<128x128xf32>
    %2 = tpu.matmul %0, %1, %cst {dimension_numbers = #tpu.dot_dimension_numbers<[1], [0], [0], [1], [0, 0, 1, 1], [], []>} : vector<128x4xf32>, vector<4x128xf32>, vector<128x128xf32> -> vector<128x128xf32>
    %c0_3 = arith.constant 0 : index
    %c0_4 = arith.constant 0 : index
    %3 = vector.load %arg3[%c0_3, %c0_4] : memref<128x128xf32, #tpu.memory_space<vmem>>, vector<128x128xf32>
    tpu.vector_store %arg3[%c0_3, %c0_4], %2 {strides = array<i32>} : memref<128x128xf32, #tpu.memory_space<vmem>>, vector<128x128xf32>,
    %cst_5 = arith.constant dense<0.000000e+00> : vector<128xf32>
    %4 = vector.multi_reduction <add>, %2, %cst_5 [0] : vector<128x128xf32> to vector<128xf32>
    %5 = vector.shape_cast %4 : vector<128xf32> to vector<1x128xf32>
    %c0_6 = arith.constant 0 : index
    %c0_7 = arith.constant 0 : index
    %6 = vector.load %arg4[%c0_6, %c0_7] : memref<8x128xf32, #tpu.memory_space<vmem>>, vector<1x128xf32>
    tpu.vector_store %arg4[%c0_6, %c0_7], %5 {strides = array<i32>} : memref<8x128xf32, #tpu.memory_space<vmem>>, vector<1x128xf32>,
    %7 = arith.mulf %2, %2 : vector<128x128xf32>
    %cst_8 = arith.constant dense<0.000000e+00> : vector<128xf32>
    %8 = vector.multi_reduction <add>, %7, %cst_8 [0] : vector<128x128xf32> to vector<128xf32>
    %9 = vector.shape_cast %8 : vector<128xf32> to vector<1x128xf32>
    %c1 = arith.constant 1 : index
    %c0_9 = arith.constant 0 : index
    %10 = vector.load %arg4[%c1, %c0_9] : memref<8x128xf32, #tpu.memory_space<vmem>>, vector<1x128xf32>
    tpu.vector_store %arg4[%c1, %c0_9], %9 {strides = array<i32>} : memref<8x128xf32, #tpu.memory_space<vmem>>, vector<1x128xf32>,
    return
  }
  func.func @transform_0(%arg0: i32) -> (i32, i32) {
    %c0_i32 = arith.constant 0 : i32
    %c0_i32_0 = arith.constant 0 : i32
    return %arg0, %c0_i32 : i32, i32
  }
  func.func @transform_1(%arg0: i32) -> (i32, i32) {
    %c0_i32 = arith.constant 0 : i32
    %c0_i32_0 = arith.constant 0 : i32
    %c0_i32_1 = arith.constant 0 : i32
    return %c0_i32, %c0_i32_0 : i32, i32
  }
  func.func @transform_2(%arg0: i32) -> (i32, i32) {
    %c0_i32 = arith.constant 0 : i32
    %c0_i32_0 = arith.constant 0 : i32
    return %arg0, %c0_i32 : i32, i32
  }
  func.func @transform_3(%arg0: i32) -> (i32, i32) {
    %c0_i32 = arith.constant 0 : i32
    %c0_i32_0 = arith.constant 0 : i32
    return %arg0, %c0_i32 : i32, i32
  }
}

</mosaic_0001>

<llo_original>
// kernel: tpu_custom_call.1
$region0: #{tpu_custom_call.1}
  #allocation0 [shape = 'u32[]', space=smem, size = 0x4, offset = 0x4, fixed_abs, tag = 'smem constant byte address 0x4 - core index']
  #allocation1 [shape = 'u32[72,128]{1,0:T(1,128)}', space=vmem, size = 0x9000, scoped, tag = 'internal scratch']
  %s0 = inlined_call_operand.vmem [shape: f32[512,4], index: 0, kind: input, shape index: {}]
  %s1 = inlined_call_operand.vmem [shape: f32[4,128], index: 1, kind: input, shape index: {}]
  %s2 = inlined_call_operand.hbm [shape: f32[512,128], index: 2, kind: output, shape index: {0}]
  %s3 = inlined_call_operand.hbm [shape: f32[32,128], index: 3, kind: output, shape index: {1}]
  %4 = xla_tuple %s2, %s3
  %s5 = sld [smem:[#allocation0]]
  $region49: #{tpu_custom_call.1} parent=0
    _
  %s7 = ssub.s32 1, %s5
  %s8 = scalar_select 0, %s7, %s5
  $region1: #{tpu_custom_call.1} parent=0
    #allocation2 [shape = 'u8[131072]{0}', space=vmem, size = 0x20000, scoped, tag = 'output window, operand 0']
    #allocation3 [shape = 's32[2]{0}', space=sflag, size = 0x8, scoped, tag = 'scoped memory for tpu_custom_call.1']
    #allocation4 [shape = 'u8[8192]{0}', space=vmem, size = 0x2000, scoped, tag = 'output window, operand 1']
    #allocation5 [shape = 's32[2]{0}', space=sflag, size = 0x8, scoped, tag = 'scoped memory for tpu_custom_call.1']
    %9 = vsyncpa [#allocation3], 0
    %s10 = scalar_lea.sflag [#allocation3], 1
    %11 = vsyncpa %s10, 0
    %12 = vsyncpa [#allocation5], 0
    %s13 = scalar_lea.sflag [#allocation5], 1
    %14 = vsyncpa %s13, 0
    loop: start=0, step=1, limit=6
    $region2: #{tpu_custom_call.1} parent=1 // loop_pre_header
      _
    $region3: #{tpu_custom_call.1} parent=1 // loop_header
      %s16 = sphi 0, %s20
      %p17 = scmp.ge.s32.totalorder %s16, 6
      %s26 = sphi 0, %s28
      %s29 = sphi 0, %s26
      %s30 = sphi 0, %s29
      %s46 = sphi 0, %s30
      %s50 = sphi 0, %s50
      %s52 = sphi 0, %s50
      %s53 = sphi 0, %s52
      %s67 = sphi 0, %s53
      %s73 = sphi 0, %s75
      %s76 = sphi 0, %s73
      %s77 = sphi 0, %s76
      %s93 = sphi 0, %s77
      %s99 = sphi 0, %s101
      %s102 = sphi 0, %s99
      %s103 = sphi 0, %s102
      %s119 = sphi 0, %s103
    $region4: #{tpu_custom_call.1} parent=1 // loop_header_branch
      %19 = sbr.rel (%p17) target = $region8
    $region5: #{tpu_custom_call.1} parent=1 // loop_body
      %s21 = ssub.s32 %s16, 1
      %s22 = ssub.s32 %s16, 2
      %s23 = sadd.s32 %s16, 1
      %s24 = ssub.s32 %s16, %s23
      %p25 = scmp.eq.s32.totalorder %s24, 0
      %s27 = sadd.s32 %s26, 1
      %s28 = scalar_select %p25, %s26, %s27
      %p31 = pneg %p25
      %p32 = scmp.eq.s32.totalorder %s16, 3
      %p33 = por %p31, %p32
      %p34 = scmp.ne.s32.totalorder %s26, %s29
      %p35 = scmp.eq.s32.totalorder %s16, 0
      %p36 = por %p34, %p35
      %p37 = scmp.ne.s32.totalorder %s26, %s29
      %p38 = scmp.eq.s32.totalorder %s21, 3
      %p39 = por %p37, %p38
      %p40 = scmp.ne.s32.totalorder %s29, %s30
      %p41 = scmp.eq.s32.totalorder %s21, 0
      %p42 = por %p40, %p41
      %p43 = scmp.ne.s32.totalorder %s29, %s30
      %p44 = scmp.eq.s32.totalorder %s22, 3
      %p45 = por %p43, %p44
      %p47 = scmp.ne.s32.totalorder %s30, %s46
      %p48 = scmp.eq.s32.totalorder %s22, 0
      %p49 = por %p47, %p48
      %s51 = sadd.s32 %s50, 1
      %p54 = scmp.eq.s32.totalorder %s16, 3
      %p55 = scmp.ne.s32.totalorder %s50, %s52
      %p56 = scmp.eq.s32.totalorder %s16, 0
      %p57 = por %p55, %p56
      %p58 = scmp.ne.s32.totalorder %s50, %s52
      %p59 = scmp.eq.s32.totalorder %s21, 3
      %p60 = por %p58, %p59
      %p61 = scmp.ne.s32.totalorder %s52, %s53
      %p62 = scmp.eq.s32.totalorder %s21, 0
      %p63 = por %p61, %p62
      %p64 = scmp.ne.s32.totalorder %s52, %s53
      %p65 = scmp.eq.s32.totalorder %s22, 3
      %p66 = por %p64, %p65
      %p68 = scmp.ne.s32.totalorder %s53, %s67
      %p69 = scmp.eq.s32.totalorder %s22, 0
      %p70 = por %p68, %p69
      %s71 = ssub.s32 %s16, %s23
      %p72 = scmp.eq.s32.totalorder %s71, 0
      %s74 = sadd.s32 %s73, 1
      %s75 = scalar_select %p72, %s73, %s74
      %p78 = pneg %p72
      %p79 = scmp.eq.s32.totalorder %s16, 3
      %p80 = por %p78, %p79
      %p81 = scmp.ne.s32.totalorder %s73, %s76
      %p82 = scmp.eq.s32.totalorder %s16, 0
      %p83 = por %p81, %p82
      %p84 = scmp.ne.s32.totalorder %s73, %s76
      %p85 = scmp.eq.s32.totalorder %s21, 3
      %p86 = por %p84, %p85
      %p87 = scmp.ne.s32.totalorder %s76, %s77
      %p88 = scmp.eq.s32.totalorder %s21, 0
      %p89 = por %p87, %p88
      %p90 = scmp.ne.s32.totalorder %s76, %s77
      %p91 = scmp.eq.s32.totalorder %s22, 3
      %p92 = por %p90, %p91
      %p94 = scmp.ne.s32.totalorder %s77, %s93
      %p95 = scmp.eq.s32.totalorder %s22, 0
      %p96 = por %p94, %p95
      %s97 = ssub.s32 %s16, %s23
      %p98 = scmp.eq.s32.totalorder %s97, 0
      %s100 = sadd.s32 %s99, 1
      %s101 = scalar_select %p98, %s99, %s100
      %p104 = pneg %p98
      %p105 = scmp.eq.s32.totalorder %s16, 3
      %p106 = por %p104, %p105
      %p107 = scmp.ne.s32.totalorder %s99, %s102
      %p108 = scmp.eq.s32.totalorder %s16, 0
      %p109 = por %p107, %p108
      %p110 = scmp.ne.s32.totalorder %s99, %s102
      %p111 = scmp.eq.s32.totalorder %s21, 3
      %p112 = por %p110, %p111
      %p113 = scmp.ne.s32.totalorder %s102, %s103
      %p114 = scmp.eq.s32.totalorder %s21, 0
      %p115 = por %p113, %p114
      %p116 = scmp.ne.s32.totalorder %s102, %s103
      %p117 = scmp.eq.s32.totalorder %s22, 3
      %p118 = por %p116, %p117
      %p120 = scmp.ne.s32.totalorder %s103, %s119
      %p121 = scmp.eq.s32.totalorder %s22, 0
      %p122 = por %p120, %p121
      %p123 = scmp.le.s32.totalorder 1, %s16
      %p124 = scmp.lt.s32.totalorder %s16, 5
      %p125 = pnand %p123, %p124
      %p126 = pneg %p125
      // Predicated region
      $region9: #{tpu_custom_call.1} parent=5 // pred_check
        _
      $region10: #{tpu_custom_call.1} parent=5 // pred_check_branch
        %128 = sbr.rel (%p125) target = $region12
      $region11: #{tpu_custom_call.1} parent=5 // pred_region
        %s129 = ssub.s32 %s16, 1
        // Predicated region
        $region13: #{tpu_custom_call.1} parent=11 // pred_check
          %p130 = pneg %p63
        $region14: #{tpu_custom_call.1} parent=11 // pred_check_branch
          %132 = sbr.rel (%p130) target = $region16
        $region15: #{tpu_custom_call.1} parent=11 // pred_region
          _
        $region16: #{tpu_custom_call.1} parent=11 // pred_fallthru
          _
      $region12: #{tpu_custom_call.1} parent=5 // pred_fallthru
        _
      %p133 = scmp.lt.s32.totalorder %s16, 4
      // Predicated region
      $region17: #{tpu_custom_call.1} parent=5 // pred_check
        %p134 = pneg %p133
      $region18: #{tpu_custom_call.1} parent=5 // pred_check_branch
        %136 = sbr.rel (%p134) target = $region20
      $region19: #{tpu_custom_call.1} parent=5 // pred_region
        // Predicated region
        $region21: #{tpu_custom_call.1} parent=19 // pred_check
          %p137 = pneg %p36
        $region22: #{tpu_custom_call.1} parent=19 // pred_check_branch
          %139 = sbr.rel (%p137) target = $region24
        $region23: #{tpu_custom_call.1} parent=19 // pred_region
          %s140 = smul.u32 16, %s16
          %p141 = scmp.lt.s32.totalorder %s140, 63
          %s142 = scalar_select %p141, %s140, 63
          %s143 = smul.addr %s142, 8
          %s144 = scalar_lea.vmem %s0, %s143
          %s145 = smul.u32 16, %s16
        $region24: #{tpu_custom_call.1} parent=19 // pred_fallthru
          _
      $region20: #{tpu_custom_call.1} parent=5 // pred_fallthru
        _
      %p146 = scmp.le.s32.totalorder 1, %s16
      %p147 = scmp.lt.s32.totalorder %s16, 5
      %p148 = pnand %p146, %p147
      %p149 = pneg %p148
      // Predicated region
      $region25: #{tpu_custom_call.1} parent=5 // pred_check
        _
      $region26: #{tpu_custom_call.1} parent=5 // pred_check_branch
        %151 = sbr.rel (%p148) target = $region28
      $region27: #{tpu_custom_call.1} parent=5 // pred_region
        %s152 = ssub.s32 %s16, 1
        %s153 = smul.u32 16, %s21
        %p154 = scmp.lt.s32.totalorder %s153, 63
        %s155 = scalar_select %p154, %s153, 63
        %s156 = smul.addr %s155, 8
        %s157 = scalar_lea.vmem %s0, %s156
        %p158 = pneg %p42
        %p159 = pneg %p39
        %p160 = pneg %p63
        %p161 = pneg %p60
        %p162 = pneg %p89
        %p163 = pneg %p86
        %s164 = sand.u32 %s76, 1
        %s165 = scalar_lea.sflag [#allocation3], %s164
        %s166 = sand.u32 %s76, 1
        %s167 = smul.addr %s166, 128
        %s168 = scalar_lea.vmem [#allocation2], %s167
        %p169 = pneg %p115
        %p170 = pneg %p112
        %s171 = sand.u32 %s102, 1
        %s172 = scalar_lea.sflag [#allocation5], %s171
        %s173 = sand.u32 %s102, 1
        %s174 = smul.addr %s173, 8
        %s175 = scalar_lea.vmem [#allocation4], %s174
        %s176 = smul.u32 16, %s21
        %p177 = scmp.lt.s32.totalorder %s176, 63
        %s178 = scalar_select %p177, %s176, 63
        %s179 = smul.addr %s178, 8
        %s180 = scalar_lea.vmem %s0, %s179
        %s181 = smul.u32 16, %s21
        %s182 = smul.u32 16, %s21
        %v183 = vld [vmem:[%s180] sm:$0xff]
        %v184 = vld [vmem:[%s180 + $0x8] sm:$0xff]
        %v185 = vld [vmem:[%s180 + $0x10] sm:$0xff]
        %v186 = vld [vmem:[%s180 + $0x18] sm:$0xff]
        %v187 = vld [vmem:[%s180 + $0x20] sm:$0xff]
        %v188 = vld [vmem:[%s180 + $0x28] sm:$0xff]
        %v189 = vld [vmem:[%s180 + $0x30] sm:$0xff]
        %v190 = vld [vmem:[%s180 + $0x38] sm:$0xff]
        %v191 = vld [vmem:[%s180 + $0x40] sm:$0xff]
        %v192 = vld [vmem:[%s180 + $0x48] sm:$0xff]
        %v193 = vld [vmem:[%s180 + $0x50] sm:$0xff]
        %v194 = vld [vmem:[%s180 + $0x58] sm:$0xff]
        %v195 = vld [vmem:[%s180 + $0x60] sm:$0xff]
        %v196 = vld [vmem:[%s180 + $0x68] sm:$0xff]
        %v197 = vld [vmem:[%s180 + $0x70] sm:$0xff]
        %v198 = vld [vmem:[%s180 + $0x78] sm:$0xff]
        %v199 = vld [vmem:[%s1] sm:$0xf]
        %vm200 = vcmask 31744
        %v202 = vsel %vm200, %v183, 0
        %v205 = vsel %vm200, %v184, 0
        %v208 = vsel %vm200, %v185, 0
        %v211 = vsel %vm200, %v186, 0
        %v214 = vsel %vm200, %v187, 0
        %v217 = vsel %vm200, %v188, 0
        %v220 = vsel %vm200, %v189, 0
        %v223 = vsel %vm200, %v190, 0
        %v226 = vsel %vm200, %v191, 0
        %v229 = vsel %vm200, %v192, 0
        %v232 = vsel %vm200, %v193, 0
        %v235 = vsel %vm200, %v194, 0
        %v238 = vsel %vm200, %v195, 0
        %v241 = vsel %vm200, %v196, 0
        %v244 = vsel %vm200, %v197, 0
        %v247 = vsel %vm200, %v198, 0
        %vm249 = vcmask 1043456
        %v251 = vsel %vm249, %v199, 0
        %253 = vmatpush.msra.mxu0 0.0
        %254 = vmatpush.msra.mxu0 0.0
        %255 = vmatpush.msra.mxu0 0.0
        %256 = vmatpush.msra.mxu0 0.0
        %257 = vmatpush.msra.mxu0 0.0
        %258 = vmatpush.msra.mxu0 0.0
        %259 = vmatpush.msra.mxu0 0.0
        %260 = vmatpush.msra.mxu0 0.0
        %261 = vmatpush.msra.mxu0 0.0
        %262 = vmatpush.msra.mxu0 0.0
        %263 = vmatpush.msra.mxu0 0.0
        %264 = vmatpush.msra.mxu0 0.0
        %265 = vmatpush.msra.mxu0 0.0
        %266 = vmatpush.msra.mxu0 0.0
        %267 = vmatpush.msra.mxu0 0.0
        %268 = vmatpush.msra.mxu0 %v251
        %269 = vmatmul.f32.gmra.mxu0 %v202
        %v270 = vpop.f32.mrf.mxu0
        %v271 = vadd.f32 0.0, %v270
        %272 = vmatmul.f32.gmra.mxu0 %v205
        %v273 = vpop.f32.mrf.mxu0
        %v274 = vadd.f32 0.0, %v273
        %275 = vmatmul.f32.gmra.mxu0 %v208
        %v276 = vpop.f32.mrf.mxu0
        %v277 = vadd.f32 0.0, %v276
        %278 = vmatmul.f32.gmra.mxu0 %v211
        %v279 = vpop.f32.mrf.mxu0
        %v280 = vadd.f32 0.0, %v279
        %281 = vmatmul.f32.gmra.mxu0 %v214
        %v282 = vpop.f32.mrf.mxu0
        %v283 = vadd.f32 0.0, %v282
        %284 = vmatmul.f32.gmra.mxu0 %v217
        %v285 = vpop.f32.mrf.mxu0
        %v286 = vadd.f32 0.0, %v285
        %287 = vmatmul.f32.gmra.mxu0 %v220
        %v288 = vpop.f32.mrf.mxu0
        %v289 = vadd.f32 0.0, %v288
        %290 = vmatmul.f32.gmra.mxu0 %v223
        %v291 = vpop.f32.mrf.mxu0
        %v292 = vadd.f32 0.0, %v291
        %293 = vmatmul.f32.gmra.mxu0 %v226
        %v294 = vpop.f32.mrf.mxu0
        %v295 = vadd.f32 0.0, %v294
        %296 = vmatmul.f32.gmra.mxu0 %v229
        %v297 = vpop.f32.mrf.mxu0
        %v298 = vadd.f32 0.0, %v297
        %299 = vmatmul.f32.gmra.mxu0 %v232
        %v300 = vpop.f32.mrf.mxu0
        %v301 = vadd.f32 0.0, %v300
        %302 = vmatmul.f32.gmra.mxu0 %v235
        %v303 = vpop.f32.mrf.mxu0
        %v304 = vadd.f32 0.0, %v303
        %305 = vmatmul.f32.gmra.mxu0 %v238
        %v306 = vpop.f32.mrf.mxu0
        %v307 = vadd.f32 0.0, %v306
        %308 = vmatmul.f32.gmra.mxu0 %v241
        %v309 = vpop.f32.mrf.mxu0
        %v310 = vadd.f32 0.0, %v309
        %311 = vmatmul.f32.gmra.mxu0 %v244
        %v312 = vpop.f32.mrf.mxu0
        %v313 = vadd.f32 0.0, %v312
        %314 = vmatmul.f32.gmra.mxu0 %v247
        %v315 = vpop.f32.mrf.mxu0
        %v316 = vadd.f32 0.0, %v315
        %317 = vdwg.mxu0
        %318 = vst [vmem:[%s168] sm:$0xff] %v271
        %319 = vst [vmem:[%s168 + $0x8] sm:$0xff] %v274
        %320 = vst [vmem:[%s168 + $0x10] sm:$0xff] %v277
        %321 = vst [vmem:[%s168 + $0x18] sm:$0xff] %v280
        %322 = vst [vmem:[%s168 + $0x20] sm:$0xff] %v283
        %323 = vst [vmem:[%s168 + $0x28] sm:$0xff] %v286
        %324 = vst [vmem:[%s168 + $0x30] sm:$0xff] %v289
        %325 = vst [vmem:[%s168 + $0x38] sm:$0xff] %v292
        %326 = vst [vmem:[%s168 + $0x40] sm:$0xff] %v295
        %327 = vst [vmem:[%s168 + $0x48] sm:$0xff] %v298
        %328 = vst [vmem:[%s168 + $0x50] sm:$0xff] %v301
        %329 = vst [vmem:[%s168 + $0x58] sm:$0xff] %v304
        %330 = vst [vmem:[%s168 + $0x60] sm:$0xff] %v307
        %331 = vst [vmem:[%s168 + $0x68] sm:$0xff] %v310
        %332 = vst [vmem:[%s168 + $0x70] sm:$0xff] %v313
        %333 = vst [vmem:[%s168 + $0x78] sm:$0xff] %v316
        %v334 = vadd.f32 %v271, %v274
        %v335 = vadd.f32 %v334, %v277
        %v336 = vadd.f32 %v335, %v280
        %v337 = vadd.f32 %v336, %v283
        %v338 = vadd.f32 %v337, %v286
        %v339 = vadd.f32 %v338, %v289
        %v340 = vadd.f32 %v339, %v292
        %v341 = vadd.f32 %v340, %v295
        %v342 = vadd.f32 %v341, %v298
        %v343 = vadd.f32 %v342, %v301
        %v344 = vadd.f32 %v343, %v304
        %v345 = vadd.f32 %v344, %v307
        %v346 = vadd.f32 %v345, %v310
        %v347 = vadd.f32 %v346, %v313
        %v348 = vadd.f32 %v347, %v316
        %v349 = vrot.slane %v348, 4
        %v350 = vadd.f32 %v348, %v349
        %v351 = vrot.slane %v350, 2
        %v352 = vadd.f32 %v350, %v351
        %v353 = vrot.slane %v352, 1
        %v354 = vadd.f32 %v352, %v353
        %355 = vst [vmem:[%s175] sm:$0x1] %v354
        %v356 = vmul.f32 %v271, %v271
        %v357 = vmul.f32 %v274, %v274
        %v358 = vmul.f32 %v277, %v277
        %v359 = vmul.f32 %v280, %v280
        %v360 = vmul.f32 %v283, %v283
        %v361 = vmul.f32 %v286, %v286
        %v362 = vmul.f32 %v289, %v289
        %v363 = vmul.f32 %v292, %v292
        %v364 = vmul.f32 %v295, %v295
        %v365 = vmul.f32 %v298, %v298
        %v366 = vmul.f32 %v301, %v301
        %v367 = vmul.f32 %v304, %v304
        %v368 = vmul.f32 %v307, %v307
        %v369 = vmul.f32 %v310, %v310
        %v370 = vmul.f32 %v313, %v313
        %v371 = vmul.f32 %v316, %v316
        %v372 = vadd.f32 %v356, %v357
        %v373 = vadd.f32 %v372, %v358
        %v374 = vadd.f32 %v373, %v359
        %v375 = vadd.f32 %v374, %v360
        %v376 = vadd.f32 %v375, %v361
        %v377 = vadd.f32 %v376, %v362
        %v378 = vadd.f32 %v377, %v363
        %v379 = vadd.f32 %v378, %v364
        %v380 = vadd.f32 %v379, %v365
        %v381 = vadd.f32 %v380, %v366
        %v382 = vadd.f32 %v381, %v367
        %v383 = vadd.f32 %v382, %v368
        %v384 = vadd.f32 %v383, %v369
        %v385 = vadd.f32 %v384, %v370
        %v386 = vadd.f32 %v385, %v371
        %v387 = vrot.slane %v386, 4
        %v388 = vadd.f32 %v386, %v387
        %v389 = vrot.slane %v388, 2
        %v390 = vadd.f32 %v388, %v389
        %v391 = vrot.slane %v390, 1
        %v392 = vadd.f32 %v390, %v391
        %393 = vst [vmem:[%s175 + $0x1] sm:$0x1] %v392
        %s394 = sand.u32 %s76, 1
        %s395 = scalar_lea.sflag [#allocation3], %s394
        %s396 = sand.u32 %s76, 1
        %s397 = smul.addr %s396, 128
        %s398 = scalar_lea.vmem [#allocation2], %s397
        %s399 = sand.u32 %s102, 1
        %s400 = scalar_lea.sflag [#allocation5], %s399
        %s401 = sand.u32 %s102, 1
        %s402 = smul.addr %s401, 8
        %s403 = scalar_lea.vmem [#allocation4], %s402
        // Predicated region
        $region29: #{tpu_custom_call.1} parent=27 // pred_check
          %p404 = pneg %p86
        $region30: #{tpu_custom_call.1} parent=27 // pred_check_branch
          %406 = sbr.rel (%p404) target = $region32
        $region31: #{tpu_custom_call.1} parent=27 // pred_region
          %s407 = smul.u32 16, %s21
          %409 = vsyncadd %s395, 0
          %s410 = smul.addr %s407, 8
          %s411 = scalar_lea.hbm %s2, %s410
          %s412 = sshll.u32 %s398, 4
          %s413 = int_to_ptr.vmem [resolvable:$true] %s412
          %s414 = sshll.u32 %s411, 4
          %s415 = int_to_ptr.hbm [resolvable:$true] %s414
          %420 = dma.vmem_to_hbm [thread:$0]  %s413, 2048, %s415, %s395, 128, 128, 8
        $region32: #{tpu_custom_call.1} parent=27 // pred_fallthru
          _
        // Predicated region
        $region33: #{tpu_custom_call.1} parent=27 // pred_check
          %p421 = pneg %p112
        $region34: #{tpu_custom_call.1} parent=27 // pred_check_branch
          %423 = sbr.rel (%p421) target = $region36
        $region35: #{tpu_custom_call.1} parent=27 // pred_region
          %425 = vsyncadd %s400, 0
          %s426 = smul.addr %s21, 8
          %s427 = scalar_lea.hbm %s3, %s426
          %s429 = sshll.u32 %s403, 4
          %s430 = int_to_ptr.vmem [resolvable:$true] %s429
          %s431 = sshll.u32 %s427, 4
          %s432 = int_to_ptr.hbm [resolvable:$true] %s431
          %434 = dma.vmem_to_hbm [thread:$0]  %s430, 128, %s432, %s400
        $region36: #{tpu_custom_call.1} parent=27 // pred_fallthru
          _
      $region28: #{tpu_custom_call.1} parent=5 // pred_fallthru
        _
      %p435 = scmp.le.s32.totalorder 2, %s16
      // Predicated region
      $region37: #{tpu_custom_call.1} parent=5 // pred_check
        %p436 = pneg %p435
      $region38: #{tpu_custom_call.1} parent=5 // pred_check_branch
        %438 = sbr.rel (%p436) target = $region40
      $region39: #{tpu_custom_call.1} parent=5 // pred_region
        %s439 = ssub.s32 %s16, 2
        // Predicated region
        $region41: #{tpu_custom_call.1} parent=39 // pred_check
          %p440 = pneg %p92
        $region42: #{tpu_custom_call.1} parent=39 // pred_check_branch
          %442 = sbr.rel (%p440) target = $region44
        $region43: #{tpu_custom_call.1} parent=39 // pred_region
          %s443 = sand.u32 %s77, 1
          %s444 = scalar_lea.sflag [#allocation3], %s443
          %s445 = sand.u32 %s77, 1
          %s446 = smul.addr %s445, 128
          %s447 = scalar_lea.vmem [#allocation2], %s446
          %449 = dma.done %s444, 2048
        $region44: #{tpu_custom_call.1} parent=39 // pred_fallthru
          _
        // Predicated region
        $region45: #{tpu_custom_call.1} parent=39 // pred_check
          %p450 = pneg %p118
        $region46: #{tpu_custom_call.1} parent=39 // pred_check_branch
          %452 = sbr.rel (%p450) target = $region48
        $region47: #{tpu_custom_call.1} parent=39 // pred_region
          %s453 = sand.u32 %s103, 1
          %s454 = scalar_lea.sflag [#allocation5], %s453
          %s455 = sand.u32 %s103, 1
          %s456 = smul.addr %s455, 8
          %s457 = scalar_lea.vmem [#allocation4], %s456
          %459 = dma.done %s454, 128
        $region48: #{tpu_custom_call.1} parent=39 // pred_fallthru
          _
      $region40: #{tpu_custom_call.1} parent=5 // pred_fallthru
        _
    $region6: #{tpu_custom_call.1} parent=1 // loop_footer
      %s20 = sadd.s32 1, %s16
    $region7: #{tpu_custom_call.1} parent=1 // loop_footer_branch
      %15 = sbr.rel target = $region3
    $region8: #{tpu_custom_call.1} parent=1 // loop_exit
      _
    %460 = vsyncpa [#allocation3], 1
    %s461 = scalar_lea.sflag [#allocation3], 1
    %462 = vsyncpa %s461, 1
    %463 = vsyncpa [#allocation5], 1
    %s464 = scalar_lea.sflag [#allocation5], 1
    %465 = vsyncpa %s464, 1

// kernel: tpu_custom_call.1
$region0: #{tpu_custom_call.1}
  #allocation0 [shape = 'u32[]', space=smem, size = 0x4, offset = 0x4, fixed_abs, tag = 'smem constant byte address 0x4 - core index']
  #allocation1 [shape = 'u32[72,128]{1,0:T(1,128)}', space=vmem, size = 0x9000, scoped, tag = 'internal scratch']
  %s0 = inlined_call_operand.vmem [shape: f32[512,4], index: 0, kind: input, shape index: {}]
  %s1 = inlined_call_operand.vmem [shape: f32[4,128], index: 1, kind: input, shape index: {}]
  %s2 = inlined_call_operand.hbm [shape: f32[512,128], index: 2, kind: output, shape index: {0}]
  %s3 = inlined_call_operand.hbm [shape: f32[32,128], index: 3, kind: output, shape index: {1}]
  %4 = xla_tuple %s2, %s3
  %s5 = sld [smem:[#allocation0]]
  $region49: #{tpu_custom_call.1} parent=0
    _
  %s7 = ssub.s32 1, %s5
  %s8 = scalar_select 0, %s7, %s5
  $region1: #{tpu_custom_call.1} parent=0
    #allocation2 [shape = 'u8[131072]{0}', space=vmem, size = 0x20000, scoped, tag = 'output window, operand 0']
    #allocation3 [shape = 's32[2]{0}', space=sflag, size = 0x8, scoped, tag = 'scoped memory for tpu_custom_call.1']
    #allocation4 [shape = 'u8[8192]{0}', space=vmem, size = 0x2000, scoped, tag = 'output window, operand 1']
    #allocation5 [shape = 's32[2]{0}', space=sflag, size = 0x8, scoped, tag = 'scoped memory for tpu_custom_call.1']
    %9 = vsyncpa [#allocation3], 0
    %s10 = scalar_lea.sflag [#allocation3], 1
    %11 = vsyncpa %s10, 0
    %12 = vsyncpa [#allocation5], 0
    %s13 = scalar_lea.sflag [#allocation5], 1
    %14 = vsyncpa %s13, 0
    loop: start=0, step=1, limit=6
    $region2: #{tpu_custom_call.1} parent=1 // loop_pre_header
      _
    $region3: #{tpu_custom_call.1} parent=1 // loop_header
      %s16 = sphi 0, %s20
      %p17 = scmp.ge.s32.totalorder %s16, 6
      %s26 = sphi 0, %s28
      %s29 = sphi 0, %s26
      %s30 = sphi 0, %s29
      %s46 = sphi 0, %s30
      %s50 = sphi 0, %s50
      %s52 = sphi 0, %s50
      %s53 = sphi 0, %s52
      %s67 = sphi 0, %s53
      %s73 = sphi 0, %s75
      %s76 = sphi 0, %s73
      %s77 = sphi 0, %s76
      %s93 = sphi 0, %s77
      %s99 = sphi 0, %s101
      %s102 = sphi 0, %s99
      %s103 = sphi 0, %s102
      %s119 = sphi 0, %s103
    $region4: #{tpu_custom_call.1} parent=1 // loop_header_branch
      %19 = sbr.rel (%p17) target = $region8
    $region5: #{tpu_custom_call.1} parent=1 // loop_body
      %s21 = ssub.s32 %s16, 1
      %s22 = ssub.s32 %s16, 2
      %s23 = sadd.s32 %s16, 1
      %s24 = ssub.s32 %s16, %s23
      %p25 = scmp.eq.s32.totalorder %s24, 0
      %s27 = sadd.s32 %s26, 1
      %s28 = scalar_select %p25, %s26, %s27
      %p31 = pneg %p25
      %p32 = scmp.eq.s32.totalorder %s16, 3
      %p33 = por %p31, %p32
      %p34 = scmp.ne.s32.totalorder %s26, %s29
      %p35 = scmp.eq.s32.totalorder %s16, 0
      %p36 = por %p34, %p35
      %p37 = scmp.ne.s32.totalorder %s26, %s29
      %p38 = scmp.eq.s32.totalorder %s21, 3
      %p39 = por %p37, %p38
      %p40 = scmp.ne.s32.totalorder %s29, %s30
      %p41 = scmp.eq.s32.totalorder %s21, 0
      %p42 = por %p40, %p41
      %p43 = scmp.ne.s32.totalorder %s29, %s30
      %p44 = scmp.eq.s32.totalorder %s22, 3
      %p45 = por %p43, %p44
      %p47 = scmp.ne.s32.totalorder %s30, %s46
      %p48 = scmp.eq.s32.totalorder %s22, 0
      %p49 = por %p47, %p48
      %s51 = sadd.s32 %s50, 1
      %p54 = scmp.eq.s32.totalorder %s16, 3
      %p55 = scmp.ne.s32.totalorder %s50, %s52
      %p56 = scmp.eq.s32.totalorder %s16, 0
      %p57 = por %p55, %p56
      %p58 = scmp.ne.s32.totalorder %s50, %s52
      %p59 = scmp.eq.s32.totalorder %s21, 3
      %p60 = por %p58, %p59
      %p61 = scmp.ne.s32.totalorder %s52, %s53
      %p62 = scmp.eq.s32.totalorder %s21, 0
      %p63 = por %p61, %p62
      %p64 = scmp.ne.s32.totalorder %s52, %s53
      %p65 = scmp.eq.s32.totalorder %s22, 3
      %p66 = por %p64, %p65
      %p68 = scmp.ne.s32.totalorder %s53, %s67
      %p69 = scmp.eq.s32.totalorder %s22, 0
      %p70 = por %p68, %p69
      %s71 = ssub.s32 %s16, %s23
      %p72 = scmp.eq.s32.totalorder %s71, 0
      %s74 = sadd.s32 %s73, 1
      %s75 = scalar_select %p72, %s73, %s74
      %p78 = pneg %p72
      %p79 = scmp.eq.s32.totalorder %s16, 3
      %p80 = por %p78, %p79
      %p81 = scmp.ne.s32.totalorder %s73, %s76
      %p82 = scmp.eq.s32.totalorder %s16, 0
      %p83 = por %p81, %p82
      %p84 = scmp.ne.s32.totalorder %s73, %s76
      %p85 = scmp.eq.s32.totalorder %s21, 3
      %p86 = por %p84, %p85
      %p87 = scmp.ne.s32.totalorder %s76, %s77
      %p88 = scmp.eq.s32.totalorder %s21, 0
      %p89 = por %p87, %p88
      %p90 = scmp.ne.s32.totalorder %s76, %s77
      %p91 = scmp.eq.s32.totalorder %s22, 3
      %p92 = por %p90, %p91
      %p94 = scmp.ne.s32.totalorder %s77, %s93
      %p95 = scmp.eq.s32.totalorder %s22, 0
      %p96 = por %p94, %p95
      %s97 = ssub.s32 %s16, %s23
      %p98 = scmp.eq.s32.totalorder %s97, 0
      %s100 = sadd.s32 %s99, 1
      %s101 = scalar_select %p98, %s99, %s100
      %p104 = pneg %p98
      %p105 = scmp.eq.s32.totalorder %s16, 3
      %p106 = por %p104, %p105
      %p107 = scmp.ne.s32.totalorder %s99, %s102
      %p108 = scmp.eq.s32.totalorder %s16, 0
      %p109 = por %p107, %p108
      %p110 = scmp.ne.s32.totalorder %s99, %s102
      %p111 = scmp.eq.s32.totalorder %s21, 3
      %p112 = por %p110, %p111
      %p113 = scmp.ne.s32.totalorder %s102, %s103
      %p114 = scmp.eq.s32.totalorder %s21, 0
      %p115 = por %p113, %p114
      %p116 = scmp.ne.s32.totalorder %s102, %s103
      %p117 = scmp.eq.s32.totalorder %s22, 3
      %p118 = por %p116, %p117
      %p120 = scmp.ne.s32.totalorder %s103, %s119
      %p121 = scmp.eq.s32.totalorder %s22, 0
      %p122 = por %p120, %p121
      %p123 = scmp.le.s32.totalorder 1, %s16
      %p124 = scmp.lt.s32.totalorder %s16, 5
      %p125 = pnand %p123, %p124
      %p126 = pneg %p125
      // Predicated region
      $region9: #{tpu_custom_call.1} parent=5 // pred_check
        _
      $region10: #{tpu_custom_call.1} parent=5 // pred_check_branch
        %128 = sbr.rel (%p125) target = $region12
      $region11: #{tpu_custom_call.1} parent=5 // pred_region
        %s129 = ssub.s32 %s16, 1
        // Predicated region
        $region13: #{tpu_custom_call.1} parent=11 // pred_check
          %p130 = pneg %p63
        $region14: #{tpu_custom_call.1} parent=11 // pred_check_branch
          %132 = sbr.rel (%p130) target = $region16
        $region15: #{tpu_custom_call.1} parent=11 // pred_region
          _
        $region16: #{tpu_custom_call.1} parent=11 // pred_fallthru
          _
      $region12: #{tpu_custom_call.1} parent=5 // pred_fallthru
        _
      %p133 = scmp.lt.s32.totalorder %s16, 4
      // Predicated region
      $region17: #{tpu_custom_call.1} parent=5 // pred_check
        %p134 = pneg %p133
      $region18: #{tpu_custom_call.1} parent=5 // pred_check_branch
        %136 = sbr.rel (%p134) target = $region20
      $region19: #{tpu_custom_call.1} parent=5 // pred_region
        // Predicated region
        $region21: #{tpu_custom_call.1} parent=19 // pred_check
          %p137 = pneg %p36
        $region22: #{tpu_custom_call.1} parent=19 // pred_check_branch
          %139 = sbr.rel (%p137) target = $region24
        $region23: #{tpu_custom_call.1} parent=19 // pred_region
          %s140 = smul.u32 16, %s16
          %p141 = scmp.lt.s32.totalorder %s140, 63
          %s142 = scalar_select %p141, %s140, 63
          %s143 = smul.addr %s142, 8
          %s144 = scalar_lea.vmem %s0, %s143
          %s145 = smul.u32 16, %s16
        $region24: #{tpu_custom_call.1} parent=19 // pred_fallthru
          _
      $region20: #{tpu_custom_call.1} parent=5 // pred_fallthru
        _
      %p146 = scmp.le.s32.totalorder 1, %s16
      %p147 = scmp.lt.s32.totalorder %s16, 5
      %p148 = pnand %p146, %p147
      %p149 = pneg %p148
      // Predicated region
      $region25: #{tpu_custom_call.1} parent=5 // pred_check
        _
      $region26: #{tpu_custom_call.1} parent=5 // pred_check_branch
        %151 = sbr.rel (%p148) target = $region28
      $region27: #{tpu_custom_call.1} parent=5 // pred_region
        %s152 = ssub.s32 %s16, 1
        %s153 = smul.u32 16, %s21
        %p154 = scmp.lt.s32.totalorder %s153, 63
        %s155 = scalar_select %p154, %s153, 63
        %s156 = smul.addr %s155, 8
        %s157 = scalar_lea.vmem %s0, %s156
        %p158 = pneg %p42
        %p159 = pneg %p39
        %p160 = pneg %p63
        %p161 = pneg %p60
        %p162 = pneg %p89
        %p163 = pneg %p86
        %s164 = sand.u32 %s76, 1
        %s165 = scalar_lea.sflag [#allocation3], %s164
        %s166 = sand.u32 %s76, 1
        %s167 = smul.addr %s166, 128
        %s168 = scalar_lea.vmem [#allocation2], %s167
        %p169 = pneg %p115
        %p170 = pneg %p112
        %s171 = sand.u32 %s102, 1
        %s172 = scalar_lea.sflag [#allocation5], %s171
        %s173 = sand.u32 %s102, 1
        %s174 = smul.addr %s173, 8
        %s175 = scalar_lea.vmem [#allocation4], %s174
        %s176 = smul.u32 16, %s21
        %p177 = scmp.lt.s32.totalorder %s176, 63
        %s178 = scalar_select %p177, %s176, 63
        %s179 = smul.addr %s178, 8
        %s180 = scalar_lea.vmem %s0, %s179
        %s181 = smul.u32 16, %s21
        %s182 = smul.u32 16, %s21
        %v183 = vld [vmem:[%s180] sm:$0xff]
        %v184 = vld [vmem:[%s180 + $0x8] sm:$0xff]
        %v185 = vld [vmem:[%s180 + $0x10] sm:$0xff]
        %v186 = vld [vmem:[%s180 + $0x18] sm:$0xff]
        %v187 = vld [vmem:[%s180 + $0x20] sm:$0xff]
        %v188 = vld [vmem:[%s180 + $0x28] sm:$0xff]
        %v189 = vld [vmem:[%s180 + $0x30] sm:$0xff]
        %v190 = vld [vmem:[%s180 + $0x38] sm:$0xff]
        %v191 = vld [vmem:[%s180 + $0x40] sm:$0xff]
        %v192 = vld [vmem:[%s180 + $0x48] sm:$0xff]
        %v193 = vld [vmem:[%s180 + $0x50] sm:$0xff]
        %v194 = vld [vmem:[%s180 + $0x58] sm:$0xff]
        %v195 = vld [vmem:[%s180 + $0x60] sm:$0xff]
        %v196 = vld [vmem:[%s180 + $0x68] sm:$0xff]
        %v197 = vld [vmem:[%s180 + $0x70] sm:$0xff]
        %v198 = vld [vmem:[%s180 + $0x78] sm:$0xff]
        %v199 = vld [vmem:[%s1] sm:$0xf]
        %vm200 = vcmask 31744
        %v202 = vsel %vm200, %v183, 0
        %v205 = vsel %vm200, %v184, 0
        %v208 = vsel %vm200, %v185, 0
        %v211 = vsel %vm200, %v186, 0
        %v214 = vsel %vm200, %v187, 0
        %v217 = vsel %vm200, %v188, 0
        %v220 = vsel %vm200, %v189, 0
        %v223 = vsel %vm200, %v190, 0
        %v226 = vsel %vm200, %v191, 0
        %v229 = vsel %vm200, %v192, 0
        %v232 = vsel %vm200, %v193, 0
        %v235 = vsel %vm200, %v194, 0
        %v238 = vsel %vm200, %v195, 0
        %v241 = vsel %vm200, %v196, 0
        %v244 = vsel %vm200, %v197, 0
        %v247 = vsel %vm200, %v198, 0
        %vm249 = vcmask 1043456
        %v251 = vsel %vm249, %v199, 0
        %253 = vmatpush.msra.mxu0 0.0
        %254 = vmatpush.msra.mxu0 0.0
        %255 = vmatpush.msra.mxu0 0.0
        %256 = vmatpush.msra.mxu0 0.0
        %257 = vmatpush.msra.mxu0 0.0
        %258 = vmatpush.msra.mxu0 0.0
        %259 = vmatpush.msra.mxu0 0.0
        %260 = vmatpush.msra.mxu0 0.0
        %261 = vmatpush.msra.mxu0 0.0
        %262 = vmatpush.msra.mxu0 0.0
        %263 = vmatpush.msra.mxu0 0.0
        %264 = vmatpush.msra.mxu0 0.0
        %265 = vmatpush.msra.mxu0 0.0
        %266 = vmatpush.msra.mxu0 0.0
        %267 = vmatpush.msra.mxu0 0.0
        %268 = vmatpush.msra.mxu0 %v251
        %269 = vmatmul.f32.gmra.mxu0 %v202
        %v270 = vpop.f32.mrf.mxu0
        %v271 = vadd.f32 0.0, %v270
        %272 = vmatmul.f32.gmra.mxu0 %v205
        %v273 = vpop.f32.mrf.mxu0
        %v274 = vadd.f32 0.0, %v273
        %275 = vmatmul.f32.gmra.mxu0 %v208
        %v276 = vpop.f32.mrf.mxu0
        %v277 = vadd.f32 0.0, %v276
        %278 = vmatmul.f32.gmra.mxu0 %v211
        %v279 = vpop.f32.mrf.mxu0
        %v280 = vadd.f32 0.0, %v279
        %281 = vmatmul.f32.gmra.mxu0 %v214
        %v282 = vpop.f32.mrf.mxu0
        %v283 = vadd.f32 0.0, %v282
        %284 = vmatmul.f32.gmra.mxu0 %v217
        %v285 = vpop.f32.mrf.mxu0
        %v286 = vadd.f32 0.0, %v285
        %287 = vmatmul.f32.gmra.mxu0 %v220
        %v288 = vpop.f32.mrf.mxu0
        %v289 = vadd.f32 0.0, %v288
        %290 = vmatmul.f32.gmra.mxu0 %v223
        %v291 = vpop.f32.mrf.mxu0
        %v292 = vadd.f32 0.0, %v291
        %293 = vmatmul.f32.gmra.mxu0 %v226
        %v294 = vpop.f32.mrf.mxu0
        %v295 = vadd.f32 0.0, %v294
        %296 = vmatmul.f32.gmra.mxu0 %v229
        %v297 = vpop.f32.mrf.mxu0
        %v298 = vadd.f32 0.0, %v297
        %299 = vmatmul.f32.gmra.mxu0 %v232
        %v300 = vpop.f32.mrf.mxu0
        %v301 = vadd.f32 0.0, %v300
        %302 = vmatmul.f32.gmra.mxu0 %v235
        %v303 = vpop.f32.mrf.mxu0
        %v304 = vadd.f32 0.0, %v303
        %305 = vmatmul.f32.gmra.mxu0 %v238
        %v306 = vpop.f32.mrf.mxu0
        %v307 = vadd.f32 0.0, %v306
        %308 = vmatmul.f32.gmra.mxu0 %v241
        %v309 = vpop.f32.mrf.mxu0
        %v310 = vadd.f32 0.0, %v309
        %311 = vmatmul.f32.gmra.mxu0 %v244
        %v312 = vpop.f32.mrf.mxu0
        %v313 = vadd.f32 0.0, %v312
        %314 = vmatmul.f32.gmra.mxu0 %v247
        %v315 = vpop.f32.mrf.mxu0
        %v316 = vadd.f32 0.0, %v315
        %317 = vdwg.mxu0
        %318 = vst [vmem:[%s168] sm:$0xff] %v271
        %319 = vst [vmem:[%s168 + $0x8] sm:$0xff] %v274
        %320 = vst [vmem:[%s168 + $0x10] sm:$0xff] %v277
        %321 = vst [vmem:[%s168 + $0x18] sm:$0xff] %v280
        %322 = vst [vmem:[%s168 + $0x20] sm:$0xff] %v283
        %323 = vst [vmem:[%s168 + $0x28] sm:$0xff] %v286
        %324 = vst [vmem:[%s168 + $0x30] sm:$0xff] %v289
        %325 = vst [vmem:[%s168 + $0x38] sm:$0xff] %v292
        %326 = vst [vmem:[%s168 + $0x40] sm:$0xff] %v295
        %327 = vst [vmem:[%s168 + $0x48] sm:$0xff] %v298
        %328 = vst [vmem:[%s168 + $0x50] sm:$0xff] %v301
        %329 = vst [vmem:[%s168 + $0x58] sm:$0xff] %v304
        %330 = vst [vmem:[%s168 + $0x60] sm:$0xff] %v307
        %331 = vst [vmem:[%s168 + $0x68] sm:$0xff] %v310
        %332 = vst [vmem:[%s168 + $0x70] sm:$0xff] %v313
        %333 = vst [vmem:[%s168 + $0x78] sm:$0xff] %v316
        %v334 = vadd.f32 %v271, %v274
        %v335 = vadd.f32 %v334, %v277
        %v336 = vadd.f32 %v335, %v280
        %v337 = vadd.f32 %v336, %v283
        %v338 = vadd.f32 %v337, %v286
        %v339 = vadd.f32 %v338, %v289
        %v340 = vadd.f32 %v339, %v292
        %v341 = vadd.f32 %v340, %v295
        %v342 = vadd.f32 %v341, %v298
        %v343 = vadd.f32 %v342, %v301
        %v344 = vadd.f32 %v343, %v304
        %v345 = vadd.f32 %v344, %v307
        %v346 = vadd.f32 %v345, %v310
        %v347 = vadd.f32 %v346, %v313
        %v348 = vadd.f32 %v347, %v316
        %v349 = vrot.slane %v348, 4
        %v350 = vadd.f32 %v348, %v349
        %v351 = vrot.slane %v350, 2
        %v352 = vadd.f32 %v350, %v351
        %v353 = vrot.slane %v352, 1
        %v354 = vadd.f32 %v352, %v353
        %355 = vst [vmem:[%s175] sm:$0x1] %v354
        %v356 = vmul.f32 %v271, %v271
        %v357 = vmul.f32 %v274, %v274
        %v358 = vmul.f32 %v277, %v277
        %v359 = vmul.f32 %v280, %v280
        %v360 = vmul.f32 %v283, %v283
        %v361 = vmul.f32 %v286, %v286
        %v362 = vmul.f32 %v289, %v289
        %v363 = vmul.f32 %v292, %v292
        %v364 = vmul.f32 %v295, %v295
        %v365 = vmul.f32 %v298, %v298
        %v366 = vmul.f32 %v301, %v301
        %v367 = vmul.f32 %v304, %v304
        %v368 = vmul.f32 %v307, %v307
        %v369 = vmul.f32 %v310, %v310
        %v370 = vmul.f32 %v313, %v313
        %v371 = vmul.f32 %v316, %v316
        %v372 = vadd.f32 %v356, %v357
        %v373 = vadd.f32 %v372, %v358
        %v374 = vadd.f32 %v373, %v359
        %v375 = vadd.f32 %v374, %v360
        %v376 = vadd.f32 %v375, %v361
        %v377 = vadd.f32 %v376, %v362
        %v378 = vadd.f32 %v377, %v363
        %v379 = vadd.f32 %v378, %v364
        %v380 = vadd.f32 %v379, %v365
        %v381 = vadd.f32 %v380, %v366
        %v382 = vadd.f32 %v381, %v367
        %v383 = vadd.f32 %v382, %v368
        %v384 = vadd.f32 %v383, %v369
        %v385 = vadd.f32 %v384, %v370
        %v386 = vadd.f32 %v385, %v371
        %v387 = vrot.slane %v386, 4
        %v388 = vadd.f32 %v386, %v387
        %v389 = vrot.slane %v388, 2
        %v390 = vadd.f32 %v388, %v389
        %v391 = vrot.slane %v390, 1
        %v392 = vadd.f32 %v390, %v391
        %393 = vst [vmem:[%s175 + $0x1] sm:$0x1] %v392
        %s394 = sand.u32 %s76, 1
        %s395 = scalar_lea.sflag [#allocation3], %s394
        %s396 = sand.u32 %s76, 1
        %s397 = smul.addr %s396, 128
        %s398 = scalar_lea.vmem [#allocation2], %s397
        %s399 = sand.u32 %s102, 1
        %s400 = scalar_lea.sflag [#allocation5], %s399
        %s401 = sand.u32 %s102, 1
        %s402 = smul.addr %s401, 8
        %s403 = scalar_lea.vmem [#allocation4], %s402
        // Predicated region
        $region29: #{tpu_custom_call.1} parent=27 // pred_check
          %p404 = pneg %p86
        $region30: #{tpu_custom_call.1} parent=27 // pred_check_branch
          %406 = sbr.rel (%p404) target = $region32
        $region31: #{tpu_custom_call.1} parent=27 // pred_region
          %s407 = smul.u32 16, %s21
          %409 = vsyncadd %s395, 0
          %s410 = smul.addr %s407, 8
          %s411 = scalar_lea.hbm %s2, %s410
          %s412 = sshll.u32 %s398, 4
          %s413 = int_to_ptr.vmem [resolvable:$true] %s412
          %s414 = sshll.u32 %s411, 4
          %s415 = int_to_ptr.hbm [resolvable:$true] %s414
          %420 = dma.vmem_to_hbm [thread:$0]  %s413, 2048, %s415, %s395, 128, 128, 8
        $region32: #{tpu_custom_call.1} parent=27 // pred_fallthru
          _
        // Predicated region
        $region33: #{tpu_custom_call.1} parent=27 // pred_check
          %p421 = pneg %p112
        $region34: #{tpu_custom_call.1} parent=27 // pred_check_branch
          %423 = sbr.rel (%p421) target = $region36
        $region35: #{tpu_custom_call.1} parent=27 // pred_region
          %425 = vsyncadd %s400, 0
          %s426 = smul.addr %s21, 8
          %s427 = scalar_lea.hbm %s3, %s426
          %s429 = sshll.u32 %s403, 4
          %s430 = int_to_ptr.vmem [resolvable:$true] %s429
          %s431 = sshll.u32 %s427, 4
          %s432 = int_to_ptr.hbm [resolvable:$true] %s431
          %434 = dma.vmem_to_hbm [thread:$0]  %s430, 128, %s432, %s400
        $region36: #{tpu_custom_call.1} parent=27 // pred_fallthru
          _
      $region28: #{tpu_custom_call.1} parent=5 // pred_fallthru
        _
      %p435 = scmp.le.s32.totalorder 2, %s16
      // Predicated region
      $region37: #{tpu_custom_call.1} parent=5 // pred_check
        %p436 = pneg %p435
      $region38: #{tpu_custom_call.1} parent=5 // pred_check_branch
        %438 = sbr.rel (%p436) target = $region40
      $region39: #{tpu_custom_call.1} parent=5 // pred_region
        %s439 = ssub.s32 %s16, 2
        // Predicated region
        $region41: #{tpu_custom_call.1} parent=39 // pred_check
          %p440 = pneg %p92
        $region42: #{tpu_custom_call.1} parent=39 // pred_check_branch
          %442 = sbr.rel (%p440) target = $region44
        $region43: #{tpu_custom_call.1} parent=39 // pred_region
          %s443 = sand.u32 %s77, 1
          %s444 = scalar_lea.sflag [#allocation3], %s443
          %s445 = sand.u32 %s77, 1
          %s446 = smul.addr %s445, 128
          %s447 = scalar_lea.vmem [#allocation2], %s446
          %449 = dma.done %s444, 2048
        $region44: #{tpu_custom_call.1} parent=39 // pred_fallthru
          _
        // Predicated region
        $region45: #{tpu_custom_call.1} parent=39 // pred_check
          %p450 = pneg %p118
        $region46: #{tpu_custom_call.1} parent=39 // pred_check_branch
          %452 = sbr.rel (%p450) target = $region48
        $region47: #{tpu_custom_call.1} parent=39 // pred_region
          %s453 = sand.u32 %s103, 1
          %s454 = scalar_lea.sflag [#allocation5], %s453
          %s455 = sand.u32 %s103, 1
          %s456 = smul.addr %s455, 8
          %s457 = scalar_lea.vmem [#allocation4], %s456
          %459 = dma.done %s454, 128
        $region48: #{tpu_custom_call.1} parent=39 // pred_fallthru
          _
      $region40: #{tpu_custom_call.1} parent=5 // pred_fallthru
        _
    $region6: #{tpu_custom_call.1} parent=1 // loop_footer
      %s20 = sadd.s32 1, %s16
    $region7: #{tpu_custom_call.1} parent=1 // loop_footer_branch
      %15 = sbr.rel target = $region3
    $region8: #{tpu_custom_call.1} parent=1 // loop_exit
      _
    %460 = vsyncpa [#allocation3], 1
    %s461 = scalar_lea.sflag [#allocation3], 1
    %462 = vsyncpa %s461, 1
    %463 = vsyncpa [#allocation5], 1
    %s464 = scalar_lea.sflag [#allocation5], 1
    %465 = vsyncpa %s464, 1

</llo_original>
